<compile_context>
chip_gen: v6e
topology: v6e:2x2x1
jax: 0.10.0
libtpu: 0.0.40
codegen_flags: <defaults>
</compile_context>

<pallas_src>
import functools

import jax
import jax.numpy as jnp
from jax.experimental import pallas as pl
from jax.experimental.pallas import tpu as pltpu


def _round_up(x, m):
    return ((x + m - 1) // m) * m


def _ohem_ce_kernel(thr_ref, logits_ref, tgt_ref, nll_out_ref, cnt_out_ref, *,
                    total_px, ignore_label, tiles_per_split, needs_tail_mask):
    i = pl.program_id(2)          # pixel-tile index within this split (arbitrary)

    # Zero the per-(batch, split) resident partial-sum rows on the first tile.
    @pl.when(i == 0)
    def _():
        nll_out_ref[...] = jnp.zeros_like(nll_out_ref)
        cnt_out_ref[...] = jnp.zeros_like(cnt_out_ref)

    logits = logits_ref[0].astype(jnp.float32)     # (C, TP)  classes x pixels
    tgt = tgt_ref[0]                               # (1, TP)  int32 labels
    neg_log_thr = thr_ref[0]                       # scalar f32 (SMEM): -log(threshold)

    c, tile_px = logits.shape

    valid = jnp.logical_and(tgt >= 0, tgt != ignore_label)
    if needs_tail_mask:
        # Only compiled when the grid over-covers h*w (partial / clamped tiles).
        t = pl.program_id(1) * tiles_per_split + i
        col = jax.lax.broadcasted_iota(jnp.int32, (1, tile_px), 1) + t * tile_px
        valid = jnp.logical_and(valid, col < total_px)

    # NOTE: labels >= C (other than ignore_label) match no class and are
    # effectively dropped (PyTorch would raise instead).
    tgt_safe = jnp.where(valid, tgt, 0)

    # Numerically stable log-sum-exp over the class (sublane) axis.
    m = jnp.max(logits, axis=0, keepdims=True)                        # (1, TP)
    lse = m + jnp.log(jnp.sum(jnp.exp(logits - m), axis=0, keepdims=True))

    # One-hot gather of the target-class logit; (C,1) sublane iota broadcasts
    # against the (1,TP) labels (no full (C,TP) iota materialization).
    class_ids = jax.lax.broadcasted_iota(jnp.int32, (c, 1), 0)        # (C, 1)
    onehot = (class_ids == tgt_safe).astype(jnp.float32)              # (C, TP)
    logit_t = jnp.sum(logits * onehot, axis=0, keepdims=True)         # (1, TP)

    nll = lse - logit_t          # -log softmax prob of the target class

    # OHEM keep test in log space: p_t <= thr  <=>  nll >= -log(thr).
    kept = jnp.logical_and(valid, nll >= neg_log_thr)

    # Lane-dense accumulation; jnp.where keeps garbage tail values (NaN/Inf in
    # masked out-of-bounds lanes) from polluting the sums.
    nll_out_ref[0, 0] += jnp.where(kept, nll, 0.0)
    cnt_out_ref[0, 0] += kept.astype(jnp.float32)


def _find_threshold(predict, target, *, ignore_label, thresh, min_kept, factor):
    """JAX port of OhemCrossEntropy2d.find_threshold on a subsampled view."""
    # TODO(synk): scipy.ndimage.zoom (order=1 for probs, order=0 for labels) has
    # no exact JAX/Pallas equivalent; both zooms are approximated by a strided
    # nearest subsample (softmax commutes with per-pixel subsampling).
    n, c, h, w = predict.shape
    # Stride only the H axis (full-row HBM bursts); subsample W in-register.
    lg = predict[:, :, ::factor, :].astype(jnp.float32)      # (n, c, hs, w)
    tg = target[:, ::factor, :]
    if w % factor == 0:
        lg = lg.reshape(n, c, -1, w // factor, factor)[..., 0]
        tg = tg.reshape(n, -1, w // factor, factor)[..., 0]
    else:
        lg = lg[..., ::factor]
        tg = tg[..., ::factor]
    tg = tg.astype(jnp.int32)                                # (n, hs, ws)

    valid = jnp.logical_and(tg >= 0, tg != ignore_label)
    num_valid = jnp.sum(valid.astype(jnp.int32))
    tg_safe = jnp.where(valid, tg, 0)

    # Target-class probability gathered directly from the NCHW subsample
    # (no NHWC transpose copy, no full softmax materialization).
    m = jnp.max(lg, axis=1, keepdims=True)
    lse = m + jnp.log(jnp.sum(jnp.exp(lg - m), axis=1, keepdims=True))
    logit_t = jnp.take_along_axis(lg, tg_safe[:, None, :, :], axis=1)
    pred = jnp.exp(logit_t - lse)[:, 0]                      # (n, hs, ws)
    pred = jnp.where(valid, pred, jnp.float32(2.0)).reshape(-1)  # invalid sort last

    min_kept_s = min_kept // (factor * factor)
    thr = jnp.float32(thresh)
    if min_kept_s > 0:                         # static Python condition
        # k-th smallest of pred == k-th largest of -pred (top_k, not a full sort).
        k = min(min_kept_s, int(pred.shape[0]))
        neg_topk, _ = jax.lax.top_k(-pred, k)
        k_idx = jnp.clip(jnp.minimum(num_valid, min_kept_s) - 1, 0, k - 1)
        kth_val = -neg_topk[k_idx]
        thr = jnp.maximum(kth_val, thr)
    thr = jnp.where(min_kept_s >= num_valid, jnp.float32(1.0), thr)
    return thr


def _neg_log_threshold(thr):
    # Guard thr <= 0 before the log; thr >= 1 keeps every valid pixel exactly.
    return jnp.where(thr >= 1.0, -jnp.inf,
                     -jnp.log(jnp.maximum(thr, jnp.float32(1e-38))))


def ohem_cross_entropy_2d(predict, target, weight=None, *, ignore_label=255,
                          thresh=0.7, min_kept=100000, factor=8, tile_px=None):
    """Pallas equivalent of OhemCrossEntropy2d.forward.

    predict: (n, c, h, w) float logits (NCHW, as in the PyTorch module); bf16
             inputs are streamed as bf16 (kernel upcasts per tile).
    target:  (n, h, w)   integer labels; ignore_label pixels are dropped.
    weight:  accepted for API parity but unused (the module's criterion is
             constructed without a class weight).
    """
    del weight
    n, c, h, w = predict.shape
    assert target.shape == (n, h, w)
    total_px = h * w

    # Data-dependent OHEM threshold (scalar), computed in plain JAX on a
    # factor^2-smaller subsample; passed to the kernel via SMEM in log space.
    thr = _find_threshold(predict, target, ignore_label=ignore_label,
                          thresh=thresh, min_kept=min_kept, factor=factor)
    thr_arr = _neg_log_threshold(thr).reshape(1).astype(jnp.float32)

    # Copy-free NCHW views: pixels on the lane axis, classes on sublanes.
    # No dtype cast here — bf16 logits halve HBM traffic.
    logits3 = predict.reshape(n, c, total_px)
    tgt3 = target.reshape(n, 1, total_px).astype(jnp.int32)

    # --- Tile sizing: big lane-dense tiles, bounded by a VMEM budget that
    # fits v7x's 64 MiB part (v5e/v6e simply run with the same comfortable tile).
    bpe = jnp.dtype(predict.dtype).itemsize
    sub = 8 if bpe >= 4 else (16 if bpe == 2 else 32)
    c_pad = _round_up(c, sub)                     # sublane-padded class count
    # Bytes/pixel resident in VMEM: logits double-buffer + labels double-buffer
    # + two double-buffered (sublane-padded) accumulator rows.
    per_px_bytes = 2 * c_pad * bpe + 2 * 8 * 4 + 4 * 8 * 4
    if tile_px is None:
        tile_px = (4 << 20) // max(c_pad * bpe, 1)     # ~4 MiB logits block
    tile_px = min(tile_px, (24 << 20) // per_px_bytes) # VMEM budget
    tile_px = min(tile_px, 65536)
    tile_px = min(tile_px, _round_up(total_px, 128))
    tile_px = max(128, (tile_px // 128) * 128)

    num_tiles = pl.cdiv(total_px, tile_px)
    # v7x has 2 TensorCores: when the batch axis alone can't feed both (odd n),
    # split the pixel-tile range across a second parallel axis.
    num_splits = 2 if (n % 2 == 1 and num_tiles >= 2) else 1
    tiles_per_split = pl.cdiv(num_tiles, num_splits)
    last_tile = num_tiles - 1
    needs_tail_mask = (num_splits * tiles_per_split * tile_px != total_px)

    def tile_idx(s, i):
        # Clamp so over-covering tiles re-read the last real block (their
        # contribution is masked out in-kernel).
        return jnp.minimum(s * tiles_per_split + i, last_tile)

    kernel = functools.partial(_ohem_ce_kernel, total_px=total_px,
                               ignore_label=ignore_label,
                               tiles_per_split=tiles_per_split,
                               needs_tail_mask=needs_tail_mask)

    vmem_limit = int(min(max(2 * per_px_bytes * tile_px, 32 << 20), 64 << 20))

    nll_part, cnt_part = pl.pallas_call(
        kernel,
        out_shape=(jax.ShapeDtypeStruct((n, num_splits, 1, tile_px), jnp.float32),
                   jax.ShapeDtypeStruct((n, num_splits, 1, tile_px), jnp.float32)),
        grid_spec=pltpu.PrefetchScalarGridSpec(
            num_scalar_prefetch=0,
            grid=(n, num_splits, tiles_per_split),
            in_specs=[
                pl.BlockSpec(memory_space=pltpu.MemorySpace.SMEM),  # -log(threshold)
                pl.BlockSpec((1, c, tile_px),
                             lambda b, s, i: (b, 0, tile_idx(s, i))),   # logits
                pl.BlockSpec((1, 1, tile_px),
                             lambda b, s, i: (b, 0, tile_idx(s, i))),   # labels
            ],
            out_specs=[
                pl.BlockSpec((1, 1, 1, tile_px),
                             lambda b, s, i: (b, s, 0, 0)),   # nll partial sums
                pl.BlockSpec((1, 1, 1, tile_px),
                             lambda b, s, i: (b, s, 0, 0)),   # kept counts
            ],
        ),
        compiler_params=pltpu.CompilerParams(
            dimension_semantics=("parallel", "parallel", "arbitrary"),
            vmem_limit_bytes=vmem_limit),
    )(thr_arr, logits3, tgt3)

    loss_sum = jnp.sum(nll_part)
    kept_cnt = jnp.sum(cnt_part)
    # nn.CrossEntropyLoss(ignore_index=...) averages over kept pixels; guard the
    # degenerate all-ignored case (PyTorch would produce NaN there).
    return jnp.where(kept_cnt > 0, loss_sum / kept_cnt, jnp.float32(0.0))


def _reference(predict, target, weight=None, *, ignore_label=255, thresh=0.7,
               min_kept=100000, factor=8):
    """Pure-JAX reference mirroring the module's forward pass."""
    del weight
    n, c, h, w = predict.shape
    thr = _find_threshold(predict, target, ignore_label=ignore_label,
                          thresh=thresh, min_kept=min_kept, factor=factor)
    neg_log_thr = _neg_log_threshold(thr)
    logits = jnp.transpose(predict, (0, 2, 3, 1)).reshape(-1, c).astype(jnp.float32)
    tgt = target.reshape(-1).astype(jnp.int32)
    valid = jnp.logical_and(tgt >= 0, tgt != ignore_label)
    tgt_safe = jnp.where(valid, tgt, 0)
    logp = jax.nn.log_softmax(logits, axis=-1)
    nll = -jnp.take_along_axis(logp, tgt_safe[:, None], axis=-1)[:, 0]
    kept = jnp.logical_and(valid, nll >= neg_log_thr)
    s = jnp.sum(jnp.where(kept, nll, 0.0))
    cnt = jnp.sum(kept.astype(jnp.float32))
    return jnp.where(cnt > 0, s / cnt, jnp.float32(0.0))


if __name__ == "__main__":
    key = jax.random.PRNGKey(0)
    k1, k2, k3 = jax.random.split(key, 3)

    n, c, h, w = 2, 4, 16, 16
    predict = jax.random.normal(k1, (n, c, h, w), dtype=jnp.float32)
    target = jax.random.randint(k2, (n, h, w), 0, c, dtype=jnp.int32)
    # Sprinkle in ignore_label pixels to exercise the mask path.
    ignore_mask = jax.random.bernoulli(k3, 0.2, (n, h, w))
    target = jnp.where(ignore_mask, 255, target)

    # Case 1: module defaults — min_kept dominates, threshold = 1.0
    # (all valid pixels kept, i.e. plain masked cross-entropy).
    loss1 = jax.block_until_ready(ohem_cross_entropy_2d(predict, target))
    ref1 = _reference(predict, target)
    assert jnp.allclose(loss1, ref1, atol=1e-5, rtol=1e-5), (loss1, ref1)

    # Case 2: aggressive OHEM — easy pixels (target prob > 0.4) are dropped.
    kw = dict(thresh=0.4, min_kept=0, factor=4)
    loss2 = jax.block_until_ready(ohem_cross_entropy_2d(predict, target, **kw))
    ref2 = _reference(predict, target, **kw)
    assert jnp.allclose(loss2, ref2, atol=1e-5, rtol=1e-5), (loss2, ref2)

    # Case 3: odd batch exercises the extra parallel pixel-split axis, and a
    # small tile forces multiple pixel tiles + tail masking.
    n3 = 3
    predict3 = jax.random.normal(k1, (n3, c, h, w), dtype=jnp.float32)
    target3 = jax.random.randint(k2, (n3, h, w), 0, c, dtype=jnp.int32)
    kw3 = dict(thresh=0.5, min_kept=64, factor=4, tile_px=128)
    loss3 = jax.block_until_ready(ohem_cross_entropy_2d(predict3, target3, **kw3))
    ref3 = _reference(predict3, target3, thresh=0.5, min_kept=64, factor=4)
    assert jnp.allclose(loss3, ref3, atol=1e-5, rtol=1e-5), (loss3, ref3)

    print("KERNEL_OK")
</pallas_src>

<mosaic_0001>
module attributes {stable_mosaic.version = 11 : i64} {
  func.func @_ohem_ce_kernel(%arg0: i32, %arg1: i32, %arg2: i32, %arg3: memref<1xf32, #tpu.memory_space<smem>>, %arg4: memref<1x4x256xf32, #tpu.memory_space<vmem>>, %arg5: memref<1x1x256xi32, #tpu.memory_space<vmem>>, %arg6: memref<1x1x1x256xf32, #tpu.memory_space<vmem>>, %arg7: memref<1x1x1x256xf32, #tpu.memory_space<vmem>>) attributes {dimension_semantics = [#tpu.dimension_semantics<parallel>, #tpu.dimension_semantics<parallel>, #tpu.dimension_semantics<arbitrary>], iteration_bounds = array<i64: 2, 1, 1>, scalar_prefetch = 0 : i64, scratch_operands = 0 : i64, tpu.core_type = #tpu.core_type<tc>, window_params = [{transform_indices = @transform_0, window_bounds = array<i64: 1>}, {transform_indices = @transform_1, window_bounds = array<i64: 1, 4, 256>}, {transform_indices = @transform_2, window_bounds = array<i64: 1, 1, 256>}, {transform_indices = @transform_3, window_bounds = array<i64: 1, 1, 1, 256>}, {transform_indices = @transform_4, window_bounds = array<i64: 1, 1, 1, 256>}]} {
    %c0_i32 = arith.constant 0 : i32
    %0 = arith.cmpi eq, %arg2, %c0_i32 : i32
    %1 = arith.extui %0 : i1 to i32
    %c0_i32_0 = arith.constant 0 : i32
    %2 = arith.cmpi ne, %1, %c0_i32_0 : i32
    scf.if %2 {
      %cst_28 = arith.constant 0.000000e+00 : f32
      %53 = vector.broadcast %cst_28 : f32 to vector<1x1x1x256xf32>
      %c0_29 = arith.constant 0 : index
      %c0_30 = arith.constant 0 : index
      %c0_31 = arith.constant 0 : index
      %c0_32 = arith.constant 0 : index
      %54 = vector.load %arg6[%c0_29, %c0_30, %c0_31, %c0_32] : memref<1x1x1x256xf32, #tpu.memory_space<vmem>>, vector<1x1x1x256xf32>
      tpu.vector_store %arg6[%c0_29, %c0_30, %c0_31, %c0_32], %53 {strides = array<i32>} : memref<1x1x1x256xf32, #tpu.memory_space<vmem>>, vector<1x1x1x256xf32>,
      %cst_33 = arith.constant 0.000000e+00 : f32
      %55 = vector.broadcast %cst_33 : f32 to vector<1x1x1x256xf32>
      %c0_34 = arith.constant 0 : index
      %c0_35 = arith.constant 0 : index
      %c0_36 = arith.constant 0 : index
      %c0_37 = arith.constant 0 : index
      %56 = vector.load %arg7[%c0_34, %c0_35, %c0_36, %c0_37] : memref<1x1x1x256xf32, #tpu.memory_space<vmem>>, vector<1x1x1x256xf32>
      tpu.vector_store %arg7[%c0_34, %c0_35, %c0_36, %c0_37], %55 {strides = array<i32>} : memref<1x1x1x256xf32, #tpu.memory_space<vmem>>, vector<1x1x1x256xf32>,
    } else {
    }
    %c0 = arith.constant 0 : index
    %c0_1 = arith.constant 0 : index
    %c0_2 = arith.constant 0 : index
    %3 = vector.load %arg4[%c0, %c0_1, %c0_2] : memref<1x4x256xf32, #tpu.memory_space<vmem>>, vector<1x4x256xf32>
    %4 = vector.shape_cast %3 : vector<1x4x256xf32> to vector<4x256xf32>
    %c0_3 = arith.constant 0 : index
    %c0_4 = arith.constant 0 : index
    %c0_5 = arith.constant 0 : index
    %5 = vector.load %arg5[%c0_3, %c0_4, %c0_5] : memref<1x1x256xi32, #tpu.memory_space<vmem>>, vector<1x1x256xi32>
    %6 = vector.shape_cast %5 : vector<1x1x256xi32> to vector<1x256xi32>
    %c0_6 = arith.constant 0 : index
    %7 = memref.load %arg3[%c0_6] : memref<1xf32, #tpu.memory_space<smem>>
    %c0_i32_7 = arith.constant 0 : i32
    %8 = vector.broadcast %c0_i32_7 : i32 to vector<1x256xi32>
    %9 = arith.cmpi sge, %6, %8 : vector<1x256xi32>
    %c255_i32 = arith.constant 255 : i32
    %10 = vector.broadcast %c255_i32 : i32 to vector<1x256xi32>
    %11 = arith.cmpi ne, %6, %10 : vector<1x256xi32>
    %12 = arith.andi %9, %11 : vector<1x256xi1>
    %c0_i32_8 = arith.constant 0 : i32
    %13 = vector.broadcast %c0_i32_8 : i32 to vector<1x256xi32>
    %14 = arith.select %12, %6, %13 : vector<1x256xi1>, vector<1x256xi32>
    %cst = arith.constant dense<0xFF800000> : vector<256xf32>
    %15 = vector.multi_reduction <maximumf>, %4, %cst [0] : vector<4x256xf32> to vector<256xf32>
    %16 = vector.shape_cast %15 : vector<256xf32> to vector<1x256xf32>
    %17 = vector.broadcast %16 : vector<1x256xf32> to vector<4x256xf32>
    %18 = arith.subf %4, %17 : vector<4x256xf32>
    %19 = math.exp %18 : vector<4x256xf32>
    %cst_9 = arith.constant dense<0.000000e+00> : vector<256xf32>
    %20 = vector.multi_reduction <add>, %19, %cst_9 [0] : vector<4x256xf32> to vector<256xf32>
    %21 = vector.shape_cast %20 : vector<256xf32> to vector<1x256xf32>
    %22 = math.log %21 : vector<1x256xf32>
    %23 = arith.addf %16, %22 : vector<1x256xf32>
    %24 = tpu.iota {dimensions = array<i32: 0>} : vector<4x1xi32>
    %25 = vector.broadcast %24 : vector<4x1xi32> to vector<4x256xi32>
    %26 = vector.broadcast %14 : vector<1x256xi32> to vector<4x256xi32>
    %27 = arith.cmpi eq, %25, %26 : vector<4x256xi32>
    %28 = arith.extui %27 : vector<4x256xi1> to vector<4x256xi32>
    %29 = arith.sitofp %28 : vector<4x256xi32> to vector<4x256xf32>
    %30 = arith.mulf %4, %29 : vector<4x256xf32>
    %cst_10 = arith.constant dense<0.000000e+00> : vector<256xf32>
    %31 = vector.multi_reduction <add>, %30, %cst_10 [0] : vector<4x256xf32> to vector<256xf32>
    %32 = vector.shape_cast %31 : vector<256xf32> to vector<1x256xf32>
    %33 = arith.subf %23, %32 : vector<1x256xf32>
    %34 = vector.broadcast %7 : f32 to vector<1x256xf32>
    %35 = arith.cmpf oge, %33, %34 : vector<1x256xf32>
    %36 = arith.andi %12, %35 : vector<1x256xi1>
    %c0_11 = arith.constant 0 : index
    %c0_12 = arith.constant 0 : index
    %c0_13 = arith.constant 0 : index
    %c0_14 = arith.constant 0 : index
    %37 = vector.load %arg6[%c0_11, %c0_12, %c0_13, %c0_14] : memref<1x1x1x256xf32, #tpu.memory_space<vmem>>, vector<1x1x1x256xf32>
    %38 = vector.shape_cast %37 : vector<1x1x1x256xf32> to vector<1x256xf32>
    %cst_15 = arith.constant 0.000000e+00 : f32
    %39 = vector.broadcast %cst_15 : f32 to vector<1x256xf32>
    %40 = arith.select %36, %33, %39 : vector<1x256xi1>, vector<1x256xf32>
    %41 = arith.addf %38, %40 : vector<1x256xf32>
    %c0_16 = arith.constant 0 : index
    %c0_17 = arith.constant 0 : index
    %c0_18 = arith.constant 0 : index
    %c0_19 = arith.constant 0 : index
    %42 = vector.load %arg6[%c0_16, %c0_17, %c0_18, %c0_19] : memref<1x1x1x256xf32, #tpu.memory_space<vmem>>, vector<1x1x1x256xf32>
    %43 = vector.shape_cast %42 : vector<1x1x1x256xf32> to vector<1x256xf32>
    %44 = vector.shape_cast %41 : vector<1x256xf32> to vector<1x1x1x256xf32>
    tpu.vector_store %arg6[%c0_16, %c0_17, %c0_18, %c0_19], %44 {strides = array<i32>} : memref<1x1x1x256xf32, #tpu.memory_space<vmem>>, vector<1x1x1x256xf32>,
    %c0_20 = arith.constant 0 : index
    %c0_21 = arith.constant 0 : index
    %c0_22 = arith.constant 0 : index
    %c0_23 = arith.constant 0 : index
    %45 = vector.load %arg7[%c0_20, %c0_21, %c0_22, %c0_23] : memref<1x1x1x256xf32, #tpu.memory_space<vmem>>, vector<1x1x1x256xf32>
    %46 = vector.shape_cast %45 : vector<1x1x1x256xf32> to vector<1x256xf32>
    %47 = arith.extui %36 : vector<1x256xi1> to vector<1x256xi32>
    %48 = arith.sitofp %47 : vector<1x256xi32> to vector<1x256xf32>
    %49 = arith.addf %46, %48 : vector<1x256xf32>
    %c0_24 = arith.constant 0 : index
    %c0_25 = arith.constant 0 : index
    %c0_26 = arith.constant 0 : index
    %c0_27 = arith.constant 0 : index
    %50 = vector.load %arg7[%c0_24, %c0_25, %c0_26, %c0_27] : memref<1x1x1x256xf32, #tpu.memory_space<vmem>>, vector<1x1x1x256xf32>
    %51 = vector.shape_cast %50 : vector<1x1x1x256xf32> to vector<1x256xf32>
    %52 = vector.shape_cast %49 : vector<1x256xf32> to vector<1x1x1x256xf32>
    tpu.vector_store %arg7[%c0_24, %c0_25, %c0_26, %c0_27], %52 {strides = array<i32>} : memref<1x1x1x256xf32, #tpu.memory_space<vmem>>, vector<1x1x1x256xf32>,
    return
  }
  func.func @transform_0(%arg0: i32, %arg1: i32, %arg2: i32) -> i32 {
    %c0_i32 = arith.constant 0 : i32
    %c0_i32_0 = arith.constant 0 : i32
    return %c0_i32 : i32
  }
  func.func @transform_1(%arg0: i32, %arg1: i32, %arg2: i32) -> (i32, i32, i32) {
    %c1_i32 = arith.constant 1 : i32
    %0 = arith.muli %arg1, %c1_i32 : i32
    %1 = arith.addi %0, %arg2 : i32
    %c0_i32 = arith.constant 0 : i32
    %2 = arith.minsi %1, %c0_i32 : i32
    %c0_i32_0 = arith.constant 0 : i32
    %c0_i32_1 = arith.constant 0 : i32
    return %arg0, %c0_i32_0, %2 : i32, i32, i32
  }
  func.func @transform_2(%arg0: i32, %arg1: i32, %arg2: i32) -> (i32, i32, i32) {
    %c1_i32 = arith.constant 1 : i32
    %0 = arith.muli %arg1, %c1_i32 : i32
    %1 = arith.addi %0, %arg2 : i32
    %c0_i32 = arith.constant 0 : i32
    %2 = arith.minsi %1, %c0_i32 : i32
    %c0_i32_0 = arith.constant 0 : i32
    %c0_i32_1 = arith.constant 0 : i32
    return %arg0, %c0_i32_0, %2 : i32, i32, i32
  }
  func.func @transform_3(%arg0: i32, %arg1: i32, %arg2: i32) -> (i32, i32, i32, i32) {
    %c0_i32 = arith.constant 0 : i32
    %c0_i32_0 = arith.constant 0 : i32
    %c0_i32_1 = arith.constant 0 : i32
    return %arg0, %arg1, %c0_i32, %c0_i32_0 : i32, i32, i32, i32
  }
  func.func @transform_4(%arg0: i32, %arg1: i32, %arg2: i32) -> (i32, i32, i32, i32) {
    %c0_i32 = arith.constant 0 : i32
    %c0_i32_0 = arith.constant 0 : i32
    %c0_i32_1 = arith.constant 0 : i32
    return %arg0, %arg1, %c0_i32, %c0_i32_0 : i32, i32, i32, i32
  }
}

</mosaic_0001>

<llo_original>
// kernel: tpu_custom_call.1
$region0: #{tpu_custom_call.1}
  #allocation0 [shape = 'u32[]', space=smem, size = 0x4, offset = 0x4, fixed_abs, tag = 'smem constant byte address 0x4 - core index']
  #allocation1 [shape = 'u32[144,128]{1,0:T(1,128)}', space=vmem, size = 0x12000, scoped, tag = 'internal scratch']
  #allocation2 [shape = 'f32[1]{0:T(128)S(6)}', space=smem, size = 0x200, scoped, tag = 'scoped memory for tpu_custom_call.1']
  %s0 = inlined_call_operand.<no memory space> [shape: f32[1], index: 0, kind: input, shape index: {}]
  %s1 = inlined_call_operand.hbm [shape: f32[2,4,256], index: 1, kind: input, shape index: {}]
  %s2 = inlined_call_operand.hbm [shape: s32[2,1,256], index: 2, kind: input, shape index: {}]
  %s3 = inlined_call_operand.hbm [shape: f32[2,1,1,256], index: 3, kind: output, shape index: {0}]
  %s4 = inlined_call_operand.hbm [shape: f32[2,1,1,256], index: 4, kind: output, shape index: {1}]
  %5 = xla_tuple %s3, %s4
  %s6 = sld [smem:[#allocation0]]
  $region65: #{tpu_custom_call.1} parent=0
    _
  %s8 = ssub.s32 1, %s6
  %s9 = scalar_select 0, %s8, %s6
  %10 = sst [smem:[#allocation2]] %s0
  $region1: #{tpu_custom_call.1} parent=0
    #allocation3 [shape = 'u8[8192]{0}', space=vmem, size = 0x2000, scoped, tag = 'input window, operand 1']
    #allocation4 [shape = 's32[2]{0}', space=sflag, size = 0x8, scoped, tag = 'scoped memory for tpu_custom_call.1']
    #allocation5 [shape = 's32[2]{0}', space=sflag, size = 0x8, scoped, tag = 'scoped memory for tpu_custom_call.1']
    #allocation6 [shape = 'u8[2048]{0}', space=vmem, size = 0x800, scoped, tag = 'input window, operand 2']
    #allocation7 [shape = 's32[2]{0}', space=sflag, size = 0x8, scoped, tag = 'scoped memory for tpu_custom_call.1']
    #allocation8 [shape = 'u8[2048]{0}', space=vmem, size = 0x800, scoped, tag = 'output window, operand 0']
    #allocation9 [shape = 'u8[2048]{0}', space=vmem, size = 0x800, scoped, tag = 'output window, operand 1']
    #allocation10 [shape = 's32[2]{0}', space=sflag, size = 0x8, scoped, tag = 'scoped memory for tpu_custom_call.1']
    %11 = vsyncpa [#allocation4], 0
    %s12 = scalar_lea.sflag [#allocation4], 1
    %13 = vsyncpa %s12, 0
    %14 = vsyncpa [#allocation7], 0
    %s15 = scalar_lea.sflag [#allocation7], 1
    %16 = vsyncpa %s15, 0
    %17 = vsyncpa [#allocation5], 0
    %s18 = scalar_lea.sflag [#allocation5], 1
    %19 = vsyncpa %s18, 0
    %20 = vsyncpa [#allocation10], 0
    %s21 = scalar_lea.sflag [#allocation10], 1
    %22 = vsyncpa %s21, 0
    loop: start=0, step=1, limit=4
    $region2: #{tpu_custom_call.1} parent=1 // loop_pre_header
      _
    $region3: #{tpu_custom_call.1} parent=1 // loop_header
      %s24 = sphi 0, %s28
      %p25 = scmp.ge.s32.totalorder %s24, 4
      %s31 = sphi 0, %s50
      %s32 = sphi 0, %s46
      %s33 = sphi 0, %s42
      %s34 = sphi 0, %s31
      %s35 = sphi 0, %s32
      %s36 = sphi 0, %s33
      %s37 = sphi 0, %s34
      %s38 = sphi 0, %s35
      %s39 = sphi 0, %s36
      %s51 = sphi 0, %s51
      %s53 = sphi 0, %s51
      %s54 = sphi 0, %s53
      %s68 = sphi 0, %s54
      %s82 = sphi 0, %s84
      %s85 = sphi 0, %s82
      %s86 = sphi 0, %s85
      %s102 = sphi 0, %s86
      %s116 = sphi 0, %s118
      %s119 = sphi 0, %s116
      %s120 = sphi 0, %s119
      %s136 = sphi 0, %s120
      %s144 = sphi 0, %s146
      %s147 = sphi 0, %s144
      %s148 = sphi 0, %s147
      %s164 = sphi 0, %s148
      %s172 = sphi 0, %s174
      %s175 = sphi 0, %s172
      %s176 = sphi 0, %s175
      %s192 = sphi 0, %s176
    $region4: #{tpu_custom_call.1} parent=1 // loop_header_branch
      %27 = sbr.rel (%p25) target = $region8
    $region5: #{tpu_custom_call.1} parent=1 // loop_body
      %s29 = ssub.s32 %s24, 1
      %s30 = ssub.s32 %s24, 2
      %s40 = sadd.s32 1, %s33
      %p41 = scmp.ge.s32.totalorder %s40, 1
      %s42 = scalar_select %p41, 0, %s40
      %s43 = sadd.s32 1, %s32
      %s44 = scalar_select %p41, %s43, %s32
      %p45 = scmp.ge.s32.totalorder %s44, 1
      %s46 = scalar_select %p45, 0, %s44
      %s47 = sadd.s32 1, %s31
      %s48 = scalar_select %p45, %s47, %s31
      %p49 = scmp.ge.s32.totalorder %s48, 2
      %s50 = scalar_select %p49, 0, %s48
      %s52 = sadd.s32 %s51, 1
      %p55 = scmp.eq.s32.totalorder %s24, 1
      %p56 = scmp.ne.s32.totalorder %s51, %s53
      %p57 = scmp.eq.s32.totalorder %s24, 0
      %p58 = por %p56, %p57
      %p59 = scmp.ne.s32.totalorder %s51, %s53
      %p60 = scmp.eq.s32.totalorder %s29, 1
      %p61 = por %p59, %p60
      %p62 = scmp.ne.s32.totalorder %s53, %s54
      %p63 = scmp.eq.s32.totalorder %s29, 0
      %p64 = por %p62, %p63
      %p65 = scmp.ne.s32.totalorder %s53, %s54
      %p66 = scmp.eq.s32.totalorder %s30, 1
      %p67 = por %p65, %p66
      %p69 = scmp.ne.s32.totalorder %s54, %s68
      %p70 = scmp.eq.s32.totalorder %s30, 0
      %p71 = por %p69, %p70
      %s72 = sadd.s32 %s32, %s33
      %p73 = scmp.lt.s32.totalorder %s72, 0
      %s74 = scalar_select %p73, %s72, 0
      %s75 = sadd.s32 %s46, %s42
      %p76 = scmp.lt.s32.totalorder %s75, 0
      %s77 = scalar_select %p76, %s75, 0
      %s78 = ssub.s32 %s31, %s50
      %s79 = ssub.s32 %s74, %s77
      %s80 = sor.u32 %s78, %s79
      %p81 = scmp.eq.s32.totalorder %s80, 0
      %s83 = sadd.s32 %s82, 1
      %s84 = scalar_select %p81, %s82, %s83
      %p87 = pneg %p81
      %p88 = scmp.eq.s32.totalorder %s24, 1
      %p89 = por %p87, %p88
      %p90 = scmp.ne.s32.totalorder %s82, %s85
      %p91 = scmp.eq.s32.totalorder %s24, 0
      %p92 = por %p90, %p91
      %p93 = scmp.ne.s32.totalorder %s82, %s85
      %p94 = scmp.eq.s32.totalorder %s29, 1
      %p95 = por %p93, %p94
      %p96 = scmp.ne.s32.totalorder %s85, %s86
      %p97 = scmp.eq.s32.totalorder %s29, 0
      %p98 = por %p96, %p97
      %p99 = scmp.ne.s32.totalorder %s85, %s86
      %p100 = scmp.eq.s32.totalorder %s30, 1
      %p101 = por %p99, %p100
      %p103 = scmp.ne.s32.totalorder %s86, %s102
      %p104 = scmp.eq.s32.totalorder %s30, 0
      %p105 = por %p103, %p104
      %s106 = sadd.s32 %s32, %s33
      %p107 = scmp.lt.s32.totalorder %s106, 0
      %s108 = scalar_select %p107, %s106, 0
      %s109 = sadd.s32 %s46, %s42
      %p110 = scmp.lt.s32.totalorder %s109, 0
      %s111 = scalar_select %p110, %s109, 0
      %s112 = ssub.s32 %s31, %s50
      %s113 = ssub.s32 %s108, %s111
      %s114 = sor.u32 %s112, %s113
      %p115 = scmp.eq.s32.totalorder %s114, 0
      %s117 = sadd.s32 %s116, 1
      %s118 = scalar_select %p115, %s116, %s117
      %p121 = pneg %p115
      %p122 = scmp.eq.s32.totalorder %s24, 1
      %p123 = por %p121, %p122
      %p124 = scmp.ne.s32.totalorder %s116, %s119
      %p125 = scmp.eq.s32.totalorder %s24, 0
      %p126 = por %p124, %p125
      %p127 = scmp.ne.s32.totalorder %s116, %s119
      %p128 = scmp.eq.s32.totalorder %s29, 1
      %p129 = por %p127, %p128
      %p130 = scmp.ne.s32.totalorder %s119, %s120
      %p131 = scmp.eq.s32.totalorder %s29, 0
      %p132 = por %p130, %p131
      %p133 = scmp.ne.s32.totalorder %s119, %s120
      %p134 = scmp.eq.s32.totalorder %s30, 1
      %p135 = por %p133, %p134
      %p137 = scmp.ne.s32.totalorder %s120, %s136
      %p138 = scmp.eq.s32.totalorder %s30, 0
      %p139 = por %p137, %p138
      %s140 = ssub.s32 %s31, %s50
      %s141 = ssub.s32 %s32, %s46
      %s142 = sor.u32 %s140, %s141
      %p143 = scmp.eq.s32.totalorder %s142, 0
      %s145 = sadd.s32 %s144, 1
      %s146 = scalar_select %p143, %s144, %s145
      %p149 = pneg %p143
      %p150 = scmp.eq.s32.totalorder %s24, 1
      %p151 = por %p149, %p150
      %p152 = scmp.ne.s32.totalorder %s144, %s147
      %p153 = scmp.eq.s32.totalorder %s24, 0
      %p154 = por %p152, %p153
      %p155 = scmp.ne.s32.totalorder %s144, %s147
      %p156 = scmp.eq.s32.totalorder %s29, 1
      %p157 = por %p155, %p156
      %p158 = scmp.ne.s32.totalorder %s147, %s148
      %p159 = scmp.eq.s32.totalorder %s29, 0
      %p160 = por %p158, %p159
      %p161 = scmp.ne.s32.totalorder %s147, %s148
      %p162 = scmp.eq.s32.totalorder %s30, 1
      %p163 = por %p161, %p162
      %p165 = scmp.ne.s32.totalorder %s148, %s164
      %p166 = scmp.eq.s32.totalorder %s30, 0
      %p167 = por %p165, %p166
      %s168 = ssub.s32 %s31, %s50
      %s169 = ssub.s32 %s32, %s46
      %s170 = sor.u32 %s168, %s169
      %p171 = scmp.eq.s32.totalorder %s170, 0
      %s173 = sadd.s32 %s172, 1
      %s174 = scalar_select %p171, %s172, %s173
      %p177 = pneg %p171
      %p178 = scmp.eq.s32.totalorder %s24, 1
      %p179 = por %p177, %p178
      %p180 = scmp.ne.s32.totalorder %s172, %s175
      %p181 = scmp.eq.s32.totalorder %s24, 0
      %p182 = por %p180, %p181
      %p183 = scmp.ne.s32.totalorder %s172, %s175
      %p184 = scmp.eq.s32.totalorder %s29, 1
      %p185 = por %p183, %p184
      %p186 = scmp.ne.s32.totalorder %s175, %s176
      %p187 = scmp.eq.s32.totalorder %s29, 0
      %p188 = por %p186, %p187
      %p189 = scmp.ne.s32.totalorder %s175, %s176
      %p190 = scmp.eq.s32.totalorder %s30, 1
      %p191 = por %p189, %p190
      %p193 = scmp.ne.s32.totalorder %s176, %s192
      %p194 = scmp.eq.s32.totalorder %s30, 0
      %p195 = por %p193, %p194
      %p196 = scmp.le.s32.totalorder 1, %s24
      %p197 = scmp.lt.s32.totalorder %s24, 3
      %p198 = pnand %p196, %p197
      %p199 = pneg %p198
      // Predicated region
      $region9: #{tpu_custom_call.1} parent=5 // pred_check
        _
      $region10: #{tpu_custom_call.1} parent=5 // pred_check_branch
        %201 = sbr.rel (%p198) target = $region12
      $region11: #{tpu_custom_call.1} parent=5 // pred_region
        %s202 = ssub.s32 %s24, 1
        // Predicated region
        $region13: #{tpu_custom_call.1} parent=11 // pred_check
          %p203 = pneg %p64
        $region14: #{tpu_custom_call.1} parent=11 // pred_check_branch
          %205 = sbr.rel (%p203) target = $region16
        $region15: #{tpu_custom_call.1} parent=11 // pred_region
          _
        $region16: #{tpu_custom_call.1} parent=11 // pred_fallthru
          _
      $region12: #{tpu_custom_call.1} parent=5 // pred_fallthru
        _
      %p206 = scmp.lt.s32.totalorder %s24, 2
      // Predicated region
      $region17: #{tpu_custom_call.1} parent=5 // pred_check
        %p207 = pneg %p206
      $region18: #{tpu_custom_call.1} parent=5 // pred_check_branch
        %209 = sbr.rel (%p207) target = $region20
      $region19: #{tpu_custom_call.1} parent=5 // pred_region
        // Predicated region
        $region21: #{tpu_custom_call.1} parent=19 // pred_check
          %p210 = pneg %p92
        $region22: #{tpu_custom_call.1} parent=19 // pred_check_branch
          %212 = sbr.rel (%p210) target = $region24
        $region23: #{tpu_custom_call.1} parent=19 // pred_region
          %s213 = sand.u32 %s82, 1
          %s214 = scalar_lea.sflag [#allocation4], %s213
          %s215 = sand.u32 %s82, 1
          %s216 = smul.addr %s215, 8
          %s217 = scalar_lea.vmem [#allocation3], %s216
          %s218 = sadd.s32 %s32, %s33
          %p219 = scmp.lt.s32.totalorder %s218, 0
          %s220 = scalar_select %p219, %s218, 0
          %s221 = smul.u32 2, %s220
          %s223 = ssub.s32 128, 128
          %224 = vsyncadd %s214, %s223
          %s225 = smul.addr %s31, 2
          %s226 = sadd.s32 %s221, %s225
          %s227 = smul.addr %s226, 64
          %s228 = scalar_lea.hbm %s1, %s227
          %s230 = sshll.u32 %s217, 4
          %s231 = int_to_ptr.vmem [resolvable:$true] %s230
          %233 = dma.hbm_to_vmem [thread:$0]  %s228, 128, %s231, %s214
        $region24: #{tpu_custom_call.1} parent=19 // pred_fallthru
          _
        // Predicated region
        $region25: #{tpu_custom_call.1} parent=19 // pred_check
          %p234 = pneg %p126
        $region26: #{tpu_custom_call.1} parent=19 // pred_check_branch
          %236 = sbr.rel (%p234) target = $region28
        $region27: #{tpu_custom_call.1} parent=19 // pred_region
          %s237 = sand.u32 %s116, 1
          %s238 = scalar_lea.sflag [#allocation7], %s237
          %s239 = sand.u32 %s116, 1
          %s240 = smul.addr %s239, 2
          %s241 = scalar_lea.vmem [#allocation6], %s240
          %s242 = sadd.s32 %s32, %s33
          %p243 = scmp.lt.s32.totalorder %s242, 0
          %s244 = scalar_select %p243, %s242, 0
          %s245 = smul.u32 2, %s244
          %s247 = ssub.s32 32, 32
          %248 = vsyncadd %s238, %s247
          %s249 = smul.addr %s31, 2
          %s250 = sadd.s32 %s245, %s249
          %s251 = smul.addr %s250, 16
          %s252 = scalar_lea.hbm %s2, %s251
          %s254 = sshll.u32 %s241, 4
          %s255 = int_to_ptr.vmem [resolvable:$true] %s254
          %257 = dma.hbm_to_vmem [thread:$0]  %s252, 32, %s255, %s238
        $region28: #{tpu_custom_call.1} parent=19 // pred_fallthru
          _
      $region20: #{tpu_custom_call.1} parent=5 // pred_fallthru
        _
      %p258 = scmp.le.s32.totalorder 1, %s24
      %p259 = scmp.lt.s32.totalorder %s24, 3
      %p260 = pnand %p258, %p259
      %p261 = pneg %p260
      // Predicated region
      $region29: #{tpu_custom_call.1} parent=5 // pred_check
        _
      $region30: #{tpu_custom_call.1} parent=5 // pred_check_branch
        %263 = sbr.rel (%p260) target = $region32
      $region31: #{tpu_custom_call.1} parent=5 // pred_region
        %s264 = ssub.s32 %s24, 1
        %s265 = sand.u32 %s85, 1
        %s266 = scalar_lea.sflag [#allocation4], %s265
        %s267 = sand.u32 %s85, 1
        %s268 = smul.addr %s267, 8
        %s269 = scalar_lea.vmem [#allocation3], %s268
        // Predicated region
        $region33: #{tpu_custom_call.1} parent=31 // pred_check
          %p270 = pneg %p98
        $region34: #{tpu_custom_call.1} parent=31 // pred_check_branch
          %272 = sbr.rel (%p270) target = $region36
        $region35: #{tpu_custom_call.1} parent=31 // pred_region
          %273 = dma.done %s266, 128
        $region36: #{tpu_custom_call.1} parent=31 // pred_fallthru
          _
        %s274 = sand.u32 %s119, 1
        %s275 = scalar_lea.sflag [#allocation7], %s274
        %s276 = sand.u32 %s119, 1
        %s277 = smul.addr %s276, 2
        %s278 = scalar_lea.vmem [#allocation6], %s277
        // Predicated region
        $region37: #{tpu_custom_call.1} parent=31 // pred_check
          %p279 = pneg %p132
        $region38: #{tpu_custom_call.1} parent=31 // pred_check_branch
          %281 = sbr.rel (%p279) target = $region40
        $region39: #{tpu_custom_call.1} parent=31 // pred_region
          %282 = dma.done %s275, 32
        $region40: #{tpu_custom_call.1} parent=31 // pred_fallthru
          _
        %p283 = pneg %p64
        %p284 = pneg %p61
        %s285 = sand.u32 %s85, 1
        %s286 = scalar_lea.sflag [#allocation4], %s285
        %s287 = sand.u32 %s85, 1
        %s288 = smul.addr %s287, 8
        %s289 = scalar_lea.vmem [#allocation3], %s288
        %p290 = pneg %p98
        %p291 = pneg %p95
        %s292 = sand.u32 %s119, 1
        %s293 = scalar_lea.sflag [#allocation7], %s292
        %s294 = sand.u32 %s119, 1
        %s295 = smul.addr %s294, 2
        %s296 = scalar_lea.vmem [#allocation6], %s295
        %p297 = pneg %p132
        %p298 = pneg %p129
        %p299 = pneg %p160
        %p300 = pneg %p157
        %s301 = sand.u32 %s147, 1
        %s302 = scalar_lea.sflag [#allocation5], %s301
        %s303 = sand.u32 %s147, 1
        %s304 = smul.addr %s303, 2
        %s305 = scalar_lea.vmem [#allocation8], %s304
        %p306 = pneg %p188
        %p307 = pneg %p185
        %s308 = sand.u32 %s175, 1
        %s309 = scalar_lea.sflag [#allocation10], %s308
        %s310 = sand.u32 %s175, 1
        %s311 = smul.addr %s310, 2
        %s312 = scalar_lea.vmem [#allocation9], %s311
        %s313 = sadd.s32 %s35, %s36
        %p314 = scmp.lt.s32.totalorder %s313, 0
        %s315 = scalar_select %p314, %s313, 0
        %s316 = smul.u32 2, %s315
        %s317 = sadd.s32 %s35, %s36
        %p318 = scmp.lt.s32.totalorder %s317, 0
        %s319 = scalar_select %p318, %s317, 0
        %s320 = smul.u32 2, %s319
        %p321 = scmp.eq.s32.totalorder %s36, 0
        // Predicated region
        $region41: #{tpu_custom_call.1} parent=31 // pred_check
          %p322 = pneg %p321
        $region42: #{tpu_custom_call.1} parent=31 // pred_check_branch
          %324 = sbr.rel (%p322) target = $region44
        $region43: #{tpu_custom_call.1} parent=31 // pred_region
          %v325 = vlaneseq
          %vm326 = vcmp.ge.s32.totalorder %v325, 0
          %vm327 = vcmp.lt.s32.totalorder %v325, 256
          %vm328 = vmand %vm326, %vm327
          %329 = vst.msk [vmem:[%s305] sm:$0x3] %vm328, 0.0
          %330 = vst.msk [vmem:[%s312] sm:$0x3] %vm328, 0.0
        $region44: #{tpu_custom_call.1} parent=31 // pred_fallthru
          _
        %v331 = vld [vmem:[%s269] sm:$0xff]
        %v332 = vld [vmem:[%s278] sm:$0x3]
        %s333 = sld [smem:[#allocation2]]
        %vm334 = vcmp.ge.s32.totalorder %v332, 0
        %vm335 = vcmp.ne.s32.totalorder %v332, 255
        %vm336 = vmand %vm334, %vm335
        %v337 = vsel %vm336, %v332, 0
        %v339 = vcombine.high %v331, %v331
        %vm341 = vcmask 1043456
        %v342 = vsel %vm341, %v331, -inf
        %v343 = vrot.slane %v342, 4
        %v344 = vmax.f32 %v342, %v343
        %v345 = vrot.slane %v344, 2
        %v346 = vmax.f32 %v344, %v345
        %v347 = vrot.slane %v346, 1
        %v348 = vmax.f32 %v346, %v347
        %v349 = vsel %vm341, %v339, -inf
        %v350 = vrot.slane %v349, 4
        %v351 = vmax.f32 %v349, %v350
        %v352 = vrot.slane %v351, 2
        %v353 = vmax.f32 %v351, %v352
        %v354 = vrot.slane %v353, 1
        %v355 = vmax.f32 %v353, %v354
        %v358 = vcombine.low %v348, %v355
        %v360 = vsub.f32 %v331, %v358
        %v361 = vmul.f32 %v360, 1.442695
        %v362 = vpow.pop %v361
        %v364 = vcombine.high %v362, %v362
        %v366 = vsel %vm341, %v362, 0.0
        %v367 = vrot.slane %v366, 4
        %v368 = vadd.f32 %v366, %v367
        %v369 = vrot.slane %v368, 2
        %v370 = vadd.f32 %v368, %v369
        %v371 = vrot.slane %v370, 1
        %v372 = vadd.f32 %v370, %v371
        %v373 = vsel %vm341, %v364, 0.0
        %v374 = vrot.slane %v373, 4
        %v375 = vadd.f32 %v373, %v374
        %v376 = vrot.slane %v375, 2
        %v377 = vadd.f32 %v375, %v376
        %v378 = vrot.slane %v377, 1
        %v379 = vadd.f32 %v377, %v378
        %v380 = vlog2.pop %v372
        %v381 = vmul.f32 %v380, 0.6931472
        %v382 = vlog2.pop %v379
        %v383 = vmul.f32 %v382, 0.6931472
        %v384 = vadd.f32 %v348, %v381
        %v385 = vadd.f32 %v355, %v383
        %v386 = vlaneseq
        %v387 = vshrl.u32 %v386, 7
        %v388 = vlaneseq
        %v389 = vshrl.u32 %v388, 7
        %v390 = vsub.s32 0, %v389
        %v391 = vrot.slane %v337, %v390
        %v392 = vlaneseq
        %v393 = vshrl.u32 %v392, 7
        %v394 = vsub.s32 1, %v393
        %v395 = vrot.slane %v337, %v394
        %vm396 = vcmp.eq.s32.totalorder %v387, %v391
        %vm397 = vcmp.eq.s32.totalorder %v387, %v395
        %v398 = vsel %vm396, 1, 0
        %v399 = vsel %vm397, 1, 0
        %v400 = vcvt.s32.f32 %v398
        %v401 = vcvt.s32.f32 %v399
        %v404 = vcombine.low %v400, %v401
        %v406 = vmul.f32 %v331, %v404
        %v408 = vcombine.high %v406, %v406
        %v410 = vsel %vm341, %v406, 0.0
        %v411 = vrot.slane %v410, 4
        %v412 = vadd.f32 %v410, %v411
        %v413 = vrot.slane %v412, 2
        %v414 = vadd.f32 %v412, %v413
        %v415 = vrot.slane %v414, 1
        %v416 = vadd.f32 %v414, %v415
        %v417 = vsel %vm341, %v408, 0.0
        %v418 = vrot.slane %v417, 4
        %v419 = vadd.f32 %v417, %v418
        %v420 = vrot.slane %v419, 2
        %v421 = vadd.f32 %v419, %v420
        %v422 = vrot.slane %v421, 1
        %v423 = vadd.f32 %v421, %v422
        %v424 = vsub.f32 %v384, %v416
        %v425 = vsub.f32 %v385, %v423
        %v426 = vstv %s333
        %vm427 = vcmp.ge.f32.partialorder %v424, %v426
        %vm428 = vcmp.ge.f32.partialorder %v425, %v426
        %v429 = vsel %vm427, 1, 0
        %v430 = vsel %vm428, 1, 0
        %v431 = vcombine.low %v429, %v430
        %v433 = vunpack.c.l.s4 1966171168
        %v434 = vunpack.c.0.s8 %v433
        %v435 = vlaneseq
        %v436 = vshrl.u32 %v435, 7
        %v437 = vsub.s32 %v434, %v436
        %v438 = vrot.slane %v431, %v437
        %v440 = vunpack.c.l.s4 1966171168
        %v441 = vunpack.c.0.s8 %v440
        %v442 = vlaneseq
        %v443 = vshrl.u32 %v442, 7
        %v444 = vsub.s32 %v441, %v443
        %v445 = vrot.slane %v438, %v444
        %vm446 = vcmp.ne.s32.totalorder %v445, 0
        %vm447 = vmand %vm336, %vm446
        %v448 = vld [vmem:[%s305] sm:$0x3]
        %v451 = vcombine.low %v424, %v425
        %v453 = vunpack.c.l.s4 1966171168
        %v454 = vunpack.c.0.s8 %v453
        %v455 = vlaneseq
        %v456 = vshrl.u32 %v455, 7
        %v457 = vsub.s32 %v454, %v456
        %v458 = vrot.slane %v451, %v457
        %v460 = vunpack.c.l.s4 1966171168
        %v461 = vunpack.c.0.s8 %v460
        %v462 = vlaneseq
        %v463 = vshrl.u32 %v462, 7
        %v464 = vsub.s32 %v461, %v463
        %v465 = vrot.slane %v458, %v464
        %v467 = vsel %vm447, %v465, 0.0
        %v468 = vadd.f32 %v448, %v467
        %v469 = vlaneseq
        %vm470 = vcmp.ge.s32.totalorder %v469, 0
        %vm471 = vcmp.lt.s32.totalorder %v469, 256
        %vm472 = vmand %vm470, %vm471
        %473 = vst.msk [vmem:[%s305] sm:$0x3] %vm472, %v468
        %v474 = vld [vmem:[%s312] sm:$0x3]
        %v475 = vsel %vm447, 1, 0
        %v476 = vcvt.s32.f32 %v475
        %v477 = vadd.f32 %v474, %v476
        %478 = vst.msk [vmem:[%s312] sm:$0x3] %vm472, %v477
        %s479 = sand.u32 %s147, 1
        %s480 = scalar_lea.sflag [#allocation5], %s479
        %s481 = sand.u32 %s147, 1
        %s482 = smul.addr %s481, 2
        %s483 = scalar_lea.vmem [#allocation8], %s482
        %s484 = sand.u32 %s175, 1
        %s485 = scalar_lea.sflag [#allocation10], %s484
        %s486 = sand.u32 %s175, 1
        %s487 = smul.addr %s486, 2
        %s488 = scalar_lea.vmem [#allocation9], %s487
        // Predicated region
        $region45: #{tpu_custom_call.1} parent=31 // pred_check
          %p489 = pneg %p157
        $region46: #{tpu_custom_call.1} parent=31 // pred_check_branch
          %491 = sbr.rel (%p489) target = $region48
        $region47: #{tpu_custom_call.1} parent=31 // pred_region
          %s493 = ssub.s32 32, 32
          %494 = vsyncadd %s480, %s493
          %s495 = smul.addr %s35, 2
          %s496 = smul.addr %s34, 2
          %s497 = sadd.s32 %s495, %s496
          %s498 = smul.addr %s497, 16
          %s499 = scalar_lea.hbm %s3, %s498
          %s501 = sshll.u32 %s483, 4
          %s502 = int_to_ptr.vmem [resolvable:$true] %s501
          %504 = dma.vmem_to_hbm [thread:$0]  %s502, 32, %s499, %s480
        $region48: #{tpu_custom_call.1} parent=31 // pred_fallthru
          _
        // Predicated region
        $region49: #{tpu_custom_call.1} parent=31 // pred_check
          %p505 = pneg %p185
        $region50: #{tpu_custom_call.1} parent=31 // pred_check_branch
          %507 = sbr.rel (%p505) target = $region52
        $region51: #{tpu_custom_call.1} parent=31 // pred_region
          %s509 = ssub.s32 32, 32
          %510 = vsyncadd %s485, %s509
          %s511 = smul.addr %s35, 2
          %s512 = smul.addr %s34, 2
          %s513 = sadd.s32 %s511, %s512
          %s514 = smul.addr %s513, 16
          %s515 = scalar_lea.hbm %s4, %s514
          %s517 = sshll.u32 %s488, 4
          %s518 = int_to_ptr.vmem [resolvable:$true] %s517
          %520 = dma.vmem_to_hbm [thread:$0]  %s518, 32, %s515, %s485
        $region52: #{tpu_custom_call.1} parent=31 // pred_fallthru
          _
      $region32: #{tpu_custom_call.1} parent=5 // pred_fallthru
        _
      %p521 = scmp.le.s32.totalorder 2, %s24
      // Predicated region
      $region53: #{tpu_custom_call.1} parent=5 // pred_check
        %p522 = pneg %p521
      $region54: #{tpu_custom_call.1} parent=5 // pred_check_branch
        %524 = sbr.rel (%p522) target = $region56
      $region55: #{tpu_custom_call.1} parent=5 // pred_region
        %s525 = ssub.s32 %s24, 2
        // Predicated region
        $region57: #{tpu_custom_call.1} parent=55 // pred_check
          %p526 = pneg %p163
        $region58: #{tpu_custom_call.1} parent=55 // pred_check_branch
          %528 = sbr.rel (%p526) target = $region60
        $region59: #{tpu_custom_call.1} parent=55 // pred_region
          %s529 = sand.u32 %s148, 1
          %s530 = scalar_lea.sflag [#allocation5], %s529
          %s531 = sand.u32 %s148, 1
          %s532 = smul.addr %s531, 2
          %s533 = scalar_lea.vmem [#allocation8], %s532
          %534 = dma.done %s530, 32
        $region60: #{tpu_custom_call.1} parent=55 // pred_fallthru
          _
        // Predicated region
        $region61: #{tpu_custom_call.1} parent=55 // pred_check
          %p535 = pneg %p191
        $region62: #{tpu_custom_call.1} parent=55 // pred_check_branch
          %537 = sbr.rel (%p535) target = $region64
        $region63: #{tpu_custom_call.1} parent=55 // pred_region
          %s538 = sand.u32 %s176, 1
          %s539 = scalar_lea.sflag [#allocation10], %s538
          %s540 = sand.u32 %s176, 1
          %s541 = smul.addr %s540, 2
          %s542 = scalar_lea.vmem [#allocation9], %s541
          %543 = dma.done %s539, 32
        $region64: #{tpu_custom_call.1} parent=55 // pred_fallthru
          _
      $region56: #{tpu_custom_call.1} parent=5 // pred_fallthru
        _
    $region6: #{tpu_custom_call.1} parent=1 // loop_footer
      %s28 = sadd.s32 1, %s24
    $region7: #{tpu_custom_call.1} parent=1 // loop_footer_branch
      %23 = sbr.rel target = $region3
    $region8: #{tpu_custom_call.1} parent=1 // loop_exit
      _
    %544 = vsyncpa [#allocation4], 1
    %s545 = scalar_lea.sflag [#allocation4], 1
    %546 = vsyncpa %s545, 1
    %547 = vsyncpa [#allocation7], 1
    %s548 = scalar_lea.sflag [#allocation7], 1
    %549 = vsyncpa %s548, 1
    %550 = vsyncpa [#allocation5], 1
    %s551 = scalar_lea.sflag [#allocation5], 1
    %552 = vsyncpa %s551, 1
    %553 = vsyncpa [#allocation10], 1
    %s554 = scalar_lea.sflag [#allocation10], 1
    %555 = vsyncpa %s554, 1

</llo_original>
